<compile_context>
chip_gen: v5e
topology: v5e:2x2
jax: 0.10.0
libtpu: 0.0.40
codegen_flags: <defaults>
</compile_context>

<pallas_src>
import jax
import jax.numpy as jnp
from jax.experimental import pallas as pl
from jax.experimental.pallas import tpu as pltpu


def _chomp_kernel(x_ref, o_ref):
    # x_ref: (TILE_R, L or L_out) VMEM tile; o_ref: (TILE_R, L_out) VMEM tile.
    # Static lane-range slice: keep the first L_out lanes (drop the causal
    # padding tail). Pure load/store copy; no compute.
    l_out = o_ref.shape[-1]
    o_ref[...] = x_ref[:, pl.ds(0, l_out)]


def _pick_tile_rows(rows, l_in_block, l_out, itemsize, vmem_budget_bytes):
    """Largest row tile (multiple of 8, capped) fitting the VMEM budget.

    Per grid step VMEM ~= 2 * (input block) + 2 * (output block) because
    Pallas double-buffers both sides of the pipeline.
    """
    bytes_per_row = 2 * (l_in_block + l_out) * itemsize
    tile = max(8, vmem_budget_bytes // max(bytes_per_row, 1))
    tile = min(tile, 1024)            # diminishing returns past ~512-1024 rows
    tile = max(8, (tile // 8) * 8)    # keep sublane dim a multiple of 8
    if rows <= tile:
        return rows                   # full-extent block is always legal
    return tile


def chomp1d(x: jax.Array, chomp_size: int,
            *, vmem_budget_bytes: int = 12 * 1024 * 1024) -> jax.Array:
    """Equivalent of Chomp1d(chomp_size)(x) for x of shape (N, C, L)."""
    n, c, l = x.shape
    assert 0 < chomp_size < l, "chomp_size must be in (0, L)"
    l_out = l - chomp_size
    rows = n * c

    # Collapse batch x channel into one dense row axis (contiguous, free).
    x2 = x.reshape(rows, l)

    # If the kept width is lane-aligned, never read the chomped tail at all.
    l_in_block = l_out if (l_out % 128 == 0) else l

    itemsize = jnp.dtype(x.dtype).itemsize
    tile_r = _pick_tile_rows(rows, l_in_block, l_out, itemsize, vmem_budget_bytes)
    grid = (pl.cdiv(rows, tile_r),)

    bytes_accessed = rows * (l_in_block + l_out) * itemsize

    out2 = pl.pallas_call(
        _chomp_kernel,
        out_shape=jax.ShapeDtypeStruct((rows, l_out), x.dtype),
        grid=grid,
        in_specs=[pl.BlockSpec((tile_r, l_in_block), lambda i: (i, 0))],
        out_specs=pl.BlockSpec((tile_r, l_out), lambda i: (i, 0)),
        compiler_params=pltpu.CompilerParams(
            dimension_semantics=("parallel",),
        ),
        cost_estimate=pl.CostEstimate(
            flops=0, transcendentals=0, bytes_accessed=bytes_accessed),
    )(x2)

    return out2.reshape(n, c, l_out)


if __name__ == "__main__":
    key = jax.random.PRNGKey(0)
    # Small shapes consistent with a TCN residual block input: (N, C, L).
    N, C, L = 2, 4, 16
    chomp_size = 3

    x = jax.random.normal(key, (N, C, L), dtype=jnp.float32)

    out = jax.block_until_ready(chomp1d(x, chomp_size))

    # Reference check against plain JAX slicing (same semantics as PyTorch).
    ref = x[:, :, :-chomp_size]
    assert out.shape == (N, C, L - chomp_size)
    assert out.dtype == x.dtype
    assert bool(jnp.array_equal(out, ref))

    print("KERNEL_OK")
</pallas_src>

<mosaic_0001>
module attributes {stable_mosaic.version = 11 : i64} {
  func.func @_chomp_kernel(%arg0: i32, %arg1: memref<8x16xf32, #tpu.memory_space<vmem>>, %arg2: memref<8x13xf32, #tpu.memory_space<vmem>>) attributes {dimension_semantics = [#tpu.dimension_semantics<parallel>], iteration_bounds = array<i64: 1>, scalar_prefetch = 0 : i64, scratch_operands = 0 : i64, tpu.core_type = #tpu.core_type<tc>, window_params = [{transform_indices = @transform_0, window_bounds = array<i64: 8, 16>}, {transform_indices = @transform_1, window_bounds = array<i64: 8, 13>}]} {
    %c0 = arith.constant 0 : index
    %c0_0 = arith.constant 0 : index
    %0 = vector.load %arg1[%c0, %c0_0] : memref<8x16xf32, #tpu.memory_space<vmem>>, vector<8x13xf32>
    %c0_1 = arith.constant 0 : index
    %c0_2 = arith.constant 0 : index
    %1 = vector.load %arg2[%c0_1, %c0_2] : memref<8x13xf32, #tpu.memory_space<vmem>>, vector<8x13xf32>
    tpu.vector_store %arg2[%c0_1, %c0_2], %0 {strides = array<i32>} : memref<8x13xf32, #tpu.memory_space<vmem>>, vector<8x13xf32>,
    return
  }
  func.func @transform_0(%arg0: i32) -> (i32, i32) {
    %c0_i32 = arith.constant 0 : i32
    %c0_i32_0 = arith.constant 0 : i32
    return %arg0, %c0_i32 : i32, i32
  }
  func.func @transform_1(%arg0: i32) -> (i32, i32) {
    %c0_i32 = arith.constant 0 : i32
    %c0_i32_0 = arith.constant 0 : i32
    return %arg0, %c0_i32 : i32, i32
  }
}

</mosaic_0001>

<llo_original>
// kernel: tpu_custom_call.1
$region0: #{tpu_custom_call.1}
  #allocation0 [shape = 'u32[]', space=smem, size = 0x4, offset = 0x4, fixed_abs, tag = 'smem constant byte address 0x4 - core index']
  #allocation1 [shape = 'u32[72,128]{1,0:T(1,128)}', space=vmem, size = 0x9000, scoped, tag = 'internal scratch']
  %s0 = inlined_call_operand.hbm [shape: f32[8,16], index: 0, kind: input, shape index: {}]
  %s1 = inlined_call_operand.hbm [shape: f32[8,13], index: 1, kind: output, shape index: {}]
  %s2 = sld [smem:[#allocation0]]
  $region18: #{tpu_custom_call.1} parent=0
    _
  %s4 = ssub.s32 1, %s2
  %s5 = scalar_select 0, %s4, %s2
  $region1: #{tpu_custom_call.1} parent=0
    #allocation2 [shape = 'u8[4096]{0}', space=vmem, size = 0x1000, scoped, tag = 'input window, operand 0, single buffered']
    #allocation3 [shape = 's32[1]{0}', space=sflag, size = 0x4, scoped, tag = 'scoped memory for tpu_custom_call.1']
    #allocation4 [shape = 's32[1]{0}', space=sflag, size = 0x4, scoped, tag = 'scoped memory for tpu_custom_call.1']
    #allocation5 [shape = 'u8[4096]{0}', space=vmem, size = 0x1000, scoped, tag = 'output window, operand 0, single buffered']
    %6 = vsyncpa [#allocation3], 0
    %7 = vsyncpa [#allocation4], 0
    // Predicated region
    $region2: #{tpu_custom_call.1} parent=1 // pred_check
      _
    $region3: #{tpu_custom_call.1} parent=1 // pred_check_branch
      %9 = sbr.rel (0) target = $region5
    $region4: #{tpu_custom_call.1} parent=1 // pred_region
      %11 = vsyncadd [#allocation3], 0
      %s13 = sshll.u32 %s0, 4
      %s14 = int_to_ptr.hbm [resolvable:$true] %s13
      %s15 = sshll.u32 [#allocation2], 4
      %s16 = int_to_ptr.vmem [resolvable:$true] %s15
      %18 = dma.hbm_to_vmem [thread:$0]  %s14, 128, %s16, [#allocation3]
    $region5: #{tpu_custom_call.1} parent=1 // pred_fallthru
      _
    // Predicated region
    $region6: #{tpu_custom_call.1} parent=1 // pred_check
      _
    $region7: #{tpu_custom_call.1} parent=1 // pred_check_branch
      %20 = sbr.rel (0) target = $region9
    $region8: #{tpu_custom_call.1} parent=1 // pred_region
      %22 = dma.done [#allocation3], 128
    $region9: #{tpu_custom_call.1} parent=1 // pred_fallthru
      _
    %v23 = vld [vmem:[#allocation2] sm:$0xff]
    %vm24 = vcmask 105472
    %25 = vst.msk [vmem:[#allocation5] sm:$0xff] %vm24, %v23
    // Predicated region
    $region10: #{tpu_custom_call.1} parent=1 // pred_check
      _
    $region11: #{tpu_custom_call.1} parent=1 // pred_check_branch
      %27 = sbr.rel (0) target = $region13
    $region12: #{tpu_custom_call.1} parent=1 // pred_region
      %29 = vsyncadd [#allocation4], 0
      %s31 = sshll.u32 [#allocation5], 4
      %s32 = int_to_ptr.vmem [resolvable:$true] %s31
      %s33 = sshll.u32 %s1, 4
      %s34 = int_to_ptr.hbm [resolvable:$true] %s33
      %36 = dma.vmem_to_hbm [thread:$0]  %s32, 128, %s34, [#allocation4]
    $region13: #{tpu_custom_call.1} parent=1 // pred_fallthru
      _
    // Predicated region
    $region14: #{tpu_custom_call.1} parent=1 // pred_check
      _
    $region15: #{tpu_custom_call.1} parent=1 // pred_check_branch
      %38 = sbr.rel (0) target = $region17
    $region16: #{tpu_custom_call.1} parent=1 // pred_region
      %40 = dma.done [#allocation4], 128
    $region17: #{tpu_custom_call.1} parent=1 // pred_fallthru
      _
    %41 = vsyncpa [#allocation3], 1
    %42 = vsyncpa [#allocation4], 1

</llo_original>
